<compile_context>
chip_gen: v7x
topology: tpu7x:2x2x1
jax: 0.10.0
libtpu: 0.0.40
codegen_flags: <defaults>
</compile_context>

<pallas_src>
import functools

import jax
import jax.numpy as jnp
from jax.experimental import pallas as pl
from jax.experimental.pallas import tpu as pltpu


def _focal_loss_kernel(x_ref, t_ref, w_ref, out_ref, *, gamma, n_rows):
    """Process one [tile_n, C] tile of logits.

    out_ref is a (1, 2) SMEM accumulator resident across the whole grid:
      out_ref[0, 0] += sum_i w[t_i] * (1 - pt_i)^gamma * logpt_i[t_i]
      out_ref[0, 1] += sum_i w[t_i]
    """
    i = pl.program_id(0)

    @pl.when(i == 0)
    def _init():
        out_ref[0, 0] = 0.0
        out_ref[0, 1] = 0.0

    x = x_ref[...].astype(jnp.float32)            # [tile_n, C] logits
    t = t_ref[...]                                # [tile_n, 1] int32 targets
    w = w_ref[...].astype(jnp.float32)            # [1, C] class weights

    tn, c = x.shape

    # Mask rows past the true N (last tile may be padded by the pipeline).
    row = jax.lax.broadcasted_iota(jnp.int32, (tn, 1), 0) + i * tn
    valid = row < n_rows                          # [tile_n, 1] bool
    x = jnp.where(valid, x, 0.0)                  # keep padded rows finite

    # Numerically-stable log-softmax pieces; only per-row scalars kept live
    # besides z (no full logpt / pt / mod matrices).
    m = jnp.max(x, axis=1, keepdims=True)                        # [tile_n, 1]
    z = x - m                                                    # [tile_n, C]
    lse = jnp.log(jnp.sum(jnp.exp(z), axis=1, keepdims=True))    # [tile_n, 1]

    # Build the one-hot once; fuse both gathers (z and class weight).
    cls = jax.lax.broadcasted_iota(jnp.int32, (tn, c), 1)
    onehot = (cls == t).astype(jnp.float32)                      # [tile_n, C]
    z_t = jnp.sum(onehot * z, axis=1, keepdims=True)             # z[i, target_i]
    w_t = jnp.sum(onehot * w, axis=1, keepdims=True)             # weight[target_i]

    # Focal modulation on the gathered column only.
    logpt_t = z_t - lse                           # log_softmax at target, <= 0
    pt_t = jnp.exp(logpt_t)
    one_m = jnp.maximum(1.0 - pt_t, 0.0)          # clamp tiny negative rounding
    g = float(gamma)
    if g == int(g) and 0 <= int(g) <= 8:
        # Integer-exponent multiply chain: exact, runs on the VPU (no EUP pow).
        focal = jnp.ones_like(one_m)
        for _ in range(int(g)):
            focal = focal * one_m
    else:
        focal = jnp.exp(g * jnp.log(jnp.maximum(one_m, 1e-30)))
    mod_t = focal * logpt_t                       # (1 - pt)^gamma * logpt

    w_t = jnp.where(valid, w_t, 0.0)              # padded rows contribute zero

    out_ref[0, 0] += jnp.sum(w_t * mod_t)         # weighted numerator
    out_ref[0, 1] += jnp.sum(w_t)                 # weight denominator


def _choose_tile_n(n, c, itemsize):
    """Largest power-of-two row tile whose logits block stays <= ~4 MiB
    (so the double-buffered pair stays <= ~8 MiB), pipelining-safe on
    v7x's 64 MiB VMEM and v5e's small scoped default."""
    budget = 4 * 1024 * 1024
    tile = 1024
    while tile > 8 and tile * c * itemsize > budget:
        tile //= 2
    if n <= tile:
        return n                  # single full-height block
    return tile


def focal_loss(logits, target, gamma=2.0, weight=None, tile_n=None):
    """logits: [N, C] float (f32 or bf16), target: [N] int -> scalar f32 loss."""
    n, c = logits.shape
    if weight is None:
        weight = jnp.ones((c,), jnp.float32)
    w2 = jnp.asarray(weight, jnp.float32).reshape(1, c)
    t2 = jnp.asarray(target, jnp.int32).reshape(n, 1)

    if tile_n is None:
        tile_n = _choose_tile_n(n, c, jnp.dtype(logits.dtype).itemsize)
    tile_n = int(min(tile_n, n))
    if tile_n < n:
        # Sublane constraint: a non-full block's second-to-last dim must be a
        # multiple of 8.
        tile_n = max(8, (tile_n // 8) * 8)
    grid = (pl.cdiv(n, tile_n),)

    # TODO(synk): for vocabulary-sized C (tens of thousands of classes) add a
    # second grid axis over C with an online (flash-style) max/sum-exp.

    kernel = functools.partial(_focal_loss_kernel, gamma=float(gamma), n_rows=n)

    sums = pl.pallas_call(
        kernel,
        out_shape=jax.ShapeDtypeStruct((1, 2), jnp.float32),
        grid=grid,
        in_specs=[
            pl.BlockSpec((tile_n, c), lambda i: (i, 0)),   # logits tile
            pl.BlockSpec((tile_n, 1), lambda i: (i, 0)),   # targets tile
            pl.BlockSpec((1, c), lambda i: (0, 0)),        # class weights (reused)
        ],
        out_specs=pl.BlockSpec((1, 2), lambda i: (0, 0),
                               memory_space=pltpu.MemorySpace.SMEM),
        compiler_params=pltpu.CompilerParams(
            dimension_semantics=("arbitrary",),   # sequential accumulation over N
            vmem_limit_bytes=32 * 1024 * 1024,
        ),
    )(logits, t2, w2)

    # Weighted-mean nll: divide exactly once, outside the grid loop.
    return -sums[0, 0] / sums[0, 1]


def _focal_loss_ref(logits, target, gamma=2.0, weight=None):
    """Pure-JAX reference mirroring the PyTorch module."""
    n, c = logits.shape
    if weight is None:
        weight = jnp.ones((c,), jnp.float32)
    logpt = jax.nn.log_softmax(logits.astype(jnp.float32), axis=1)
    pt = jnp.exp(logpt)
    mod = ((1.0 - pt) ** gamma) * logpt
    picked = mod[jnp.arange(n), target]
    w_t = weight[target]
    return -jnp.sum(w_t * picked) / jnp.sum(w_t)


if __name__ == "__main__":
    key = jax.random.PRNGKey(0)
    k1, k2, k3, k4 = jax.random.split(key, 4)

    # --- Test 1: small single-tile case (matches the module's [N, C] spec).
    N1, C1, gamma1 = 8, 32, 2.0
    logits1 = jax.random.normal(k1, (N1, C1), dtype=jnp.float32)
    target1 = jax.random.randint(k2, (N1,), 0, C1, dtype=jnp.int32)
    weight1 = 0.5 + 0.05 * jnp.arange(C1, dtype=jnp.float32)

    loss1 = focal_loss(logits1, target1, gamma=gamma1, weight=weight1)
    jax.block_until_ready(loss1)
    ref1 = _focal_loss_ref(logits1, target1, gamma=gamma1, weight=weight1)
    assert jnp.allclose(loss1, ref1, rtol=1e-5, atol=1e-5), (loss1, ref1)

    # --- Test 2: multi-tile grid with a masked (non-divisible) tail and a
    # different integer gamma; exercises the accumulator + row masking path.
    N2, C2, gamma2 = 37, 48, 3.0
    logits2 = jax.random.normal(k3, (N2, C2), dtype=jnp.float32)
    target2 = jax.random.randint(k4, (N2,), 0, C2, dtype=jnp.int32)
    weight2 = 1.0 + 0.02 * jnp.arange(C2, dtype=jnp.float32)

    loss2 = focal_loss(logits2, target2, gamma=gamma2, weight=weight2, tile_n=16)
    jax.block_until_ready(loss2)
    ref2 = _focal_loss_ref(logits2, target2, gamma=gamma2, weight=weight2)
    assert jnp.allclose(loss2, ref2, rtol=1e-5, atol=1e-5), (loss2, ref2)

    print("KERNEL_OK")
</pallas_src>

<mosaic_0001>
module attributes {stable_mosaic.version = 11 : i64} {
  func.func @_focal_loss_kernel(%arg0: i32, %arg1: memref<8x32xf32, #tpu.memory_space<vmem>>, %arg2: memref<8x1xi32, #tpu.memory_space<vmem>>, %arg3: memref<1x32xf32, #tpu.memory_space<vmem>>, %arg4: memref<1x2xf32, #tpu.memory_space<smem>>) attributes {dimension_semantics = [#tpu.dimension_semantics<arbitrary>], iteration_bounds = array<i64: 1>, scalar_prefetch = 0 : i64, scratch_operands = 0 : i64, tpu.core_type = #tpu.core_type<tc>, window_params = [{transform_indices = @transform_0, window_bounds = array<i64: 8, 32>}, {transform_indices = @transform_1, window_bounds = array<i64: 8, 1>}, {pipeline_mode = #tpu.pipeline_mode<synchronous>, transform_indices = @transform_2, window_bounds = array<i64: 1, 32>}, {transform_indices = @transform_3, window_bounds = array<i64: 1, 2>}]} {
    %c0_i32 = arith.constant 0 : i32
    %0 = arith.cmpi eq, %arg0, %c0_i32 : i32
    %1 = arith.extui %0 : i1 to i32
    %c0_i32_0 = arith.constant 0 : i32
    %2 = arith.cmpi ne, %1, %c0_i32_0 : i32
    scf.if %2 {
      %cst_24 = arith.constant 0.000000e+00 : f32
      %c0_25 = arith.constant 0 : index
      %c0_26 = arith.constant 0 : index
      %63 = memref.load %arg4[%c0_25, %c0_26] : memref<1x2xf32, #tpu.memory_space<smem>>
      memref.store %cst_24, %arg4[%c0_25, %c0_26] : memref<1x2xf32, #tpu.memory_space<smem>>
      %cst_27 = arith.constant 0.000000e+00 : f32
      %c0_28 = arith.constant 0 : index
      %c1_29 = arith.constant 1 : index
      %64 = memref.load %arg4[%c0_28, %c1_29] : memref<1x2xf32, #tpu.memory_space<smem>>
      memref.store %cst_27, %arg4[%c0_28, %c1_29] : memref<1x2xf32, #tpu.memory_space<smem>>
    } else {
    }
    %c0 = arith.constant 0 : index
    %c0_1 = arith.constant 0 : index
    %3 = vector.load %arg1[%c0, %c0_1] : memref<8x32xf32, #tpu.memory_space<vmem>>, vector<8x32xf32>
    %c0_2 = arith.constant 0 : index
    %c0_3 = arith.constant 0 : index
    %4 = vector.load %arg2[%c0_2, %c0_3] : memref<8x1xi32, #tpu.memory_space<vmem>>, vector<8x1xi32>
    %c0_4 = arith.constant 0 : index
    %c0_5 = arith.constant 0 : index
    %5 = vector.load %arg3[%c0_4, %c0_5] : memref<1x32xf32, #tpu.memory_space<vmem>>, vector<1x32xf32>
    %6 = tpu.iota {dimensions = array<i32: 0>} : vector<8x1xi32>
    %c8_i32 = arith.constant 8 : i32
    %7 = arith.muli %arg0, %c8_i32 : i32
    %8 = vector.broadcast %7 : i32 to vector<8x1xi32>
    %9 = arith.addi %6, %8 : vector<8x1xi32>
    %c8_i32_6 = arith.constant 8 : i32
    %10 = vector.broadcast %c8_i32_6 : i32 to vector<8x1xi32>
    %11 = arith.cmpi slt, %9, %10 : vector<8x1xi32>
    %cst = arith.constant 0.000000e+00 : f32
    %12 = vector.shape_cast %11 : vector<8x1xi1> to vector<8x1xi1>
    %13 = vector.broadcast %12 : vector<8x1xi1> to vector<8x32xi1>
    %14 = vector.broadcast %cst : f32 to vector<8x32xf32>
    %15 = arith.select %13, %3, %14 : vector<8x32xi1>, vector<8x32xf32>
    %cst_7 = arith.constant dense<0xFF800000> : vector<8xf32>
    %16 = vector.multi_reduction <maximumf>, %15, %cst_7 [1] : vector<8x32xf32> to vector<8xf32>
    %17 = vector.shape_cast %16 : vector<8xf32> to vector<8x1xf32>
    %18 = vector.broadcast %17 : vector<8x1xf32> to vector<8x32xf32>
    %19 = arith.subf %15, %18 : vector<8x32xf32>
    %20 = math.exp %19 : vector<8x32xf32>
    %cst_8 = arith.constant dense<0.000000e+00> : vector<8xf32>
    %21 = vector.multi_reduction <add>, %20, %cst_8 [1] : vector<8x32xf32> to vector<8xf32>
    %22 = vector.shape_cast %21 : vector<8xf32> to vector<8x1xf32>
    %23 = math.log %22 : vector<8x1xf32>
    %24 = tpu.iota {dimensions = array<i32: 1>} : vector<8x32xi32>
    %25 = vector.broadcast %4 : vector<8x1xi32> to vector<8x32xi32>
    %26 = arith.cmpi eq, %24, %25 : vector<8x32xi32>
    %27 = arith.extui %26 : vector<8x32xi1> to vector<8x32xi32>
    %28 = arith.sitofp %27 : vector<8x32xi32> to vector<8x32xf32>
    %29 = arith.mulf %28, %19 : vector<8x32xf32>
    %cst_9 = arith.constant dense<0.000000e+00> : vector<8xf32>
    %30 = vector.multi_reduction <add>, %29, %cst_9 [1] : vector<8x32xf32> to vector<8xf32>
    %31 = vector.shape_cast %30 : vector<8xf32> to vector<8x1xf32>
    %32 = vector.broadcast %5 : vector<1x32xf32> to vector<8x32xf32>
    %33 = arith.mulf %28, %32 : vector<8x32xf32>
    %cst_10 = arith.constant dense<0.000000e+00> : vector<8xf32>
    %34 = vector.multi_reduction <add>, %33, %cst_10 [1] : vector<8x32xf32> to vector<8xf32>
    %35 = vector.shape_cast %34 : vector<8xf32> to vector<8x1xf32>
    %36 = arith.subf %31, %23 : vector<8x1xf32>
    %37 = math.exp %36 : vector<8x1xf32>
    %cst_11 = arith.constant 1.000000e+00 : f32
    %38 = vector.broadcast %cst_11 : f32 to vector<8x1xf32>
    %39 = arith.subf %38, %37 : vector<8x1xf32>
    %cst_12 = arith.constant 0.000000e+00 : f32
    %40 = vector.broadcast %cst_12 : f32 to vector<8x1xf32>
    %41 = arith.maximumf %39, %40 : vector<8x1xf32>
    %cst_13 = arith.constant 1.000000e+00 : f32
    %42 = vector.broadcast %cst_13 : f32 to vector<8x1xf32>
    %43 = arith.mulf %42, %41 : vector<8x1xf32>
    %44 = arith.mulf %43, %41 : vector<8x1xf32>
    %45 = arith.mulf %44, %36 : vector<8x1xf32>
    %cst_14 = arith.constant 0.000000e+00 : f32
    %46 = vector.broadcast %cst_14 : f32 to vector<8x1xf32>
    %47 = arith.select %11, %35, %46 : vector<8x1xi1>, vector<8x1xf32>
    %c0_15 = arith.constant 0 : index
    %c0_16 = arith.constant 0 : index
    %48 = memref.load %arg4[%c0_15, %c0_16] : memref<1x2xf32, #tpu.memory_space<smem>>
    %49 = arith.mulf %47, %45 : vector<8x1xf32>
    %50 = vector.shape_cast %49 : vector<8x1xf32> to vector<1x8x1xf32>
    %cst_17 = arith.constant dense<0.000000e+00> : vector<1xf32>
    %51 = vector.multi_reduction <add>, %50, %cst_17 [1, 2] : vector<1x8x1xf32> to vector<1xf32>
    %52 = vector.shape_cast %51 : vector<1xf32> to vector<1x1x1xf32>
    %53 = vector.extract %52[0, 0, 0] : f32 from vector<1x1x1xf32>
    %54 = arith.addf %48, %53 : f32
    %c0_18 = arith.constant 0 : index
    %c0_19 = arith.constant 0 : index
    %55 = memref.load %arg4[%c0_18, %c0_19] : memref<1x2xf32, #tpu.memory_space<smem>>
    memref.store %54, %arg4[%c0_18, %c0_19] : memref<1x2xf32, #tpu.memory_space<smem>>
    %c0_20 = arith.constant 0 : index
    %c1 = arith.constant 1 : index
    %56 = memref.load %arg4[%c0_20, %c1] : memref<1x2xf32, #tpu.memory_space<smem>>
    %57 = vector.shape_cast %47 : vector<8x1xf32> to vector<1x8x1xf32>
    %cst_21 = arith.constant dense<0.000000e+00> : vector<1xf32>
    %58 = vector.multi_reduction <add>, %57, %cst_21 [1, 2] : vector<1x8x1xf32> to vector<1xf32>
    %59 = vector.shape_cast %58 : vector<1xf32> to vector<1x1x1xf32>
    %60 = vector.extract %59[0, 0, 0] : f32 from vector<1x1x1xf32>
    %61 = arith.addf %56, %60 : f32
    %c0_22 = arith.constant 0 : index
    %c1_23 = arith.constant 1 : index
    %62 = memref.load %arg4[%c0_22, %c1_23] : memref<1x2xf32, #tpu.memory_space<smem>>
    memref.store %61, %arg4[%c0_22, %c1_23] : memref<1x2xf32, #tpu.memory_space<smem>>
    return
  }
  func.func @transform_0(%arg0: i32) -> (i32, i32) {
    %c0_i32 = arith.constant 0 : i32
    %c0_i32_0 = arith.constant 0 : i32
    return %arg0, %c0_i32 : i32, i32
  }
  func.func @transform_1(%arg0: i32) -> (i32, i32) {
    %c0_i32 = arith.constant 0 : i32
    %c0_i32_0 = arith.constant 0 : i32
    return %arg0, %c0_i32 : i32, i32
  }
  func.func @transform_2(%arg0: i32) -> (i32, i32) {
    %c0_i32 = arith.constant 0 : i32
    %c0_i32_0 = arith.constant 0 : i32
    %c0_i32_1 = arith.constant 0 : i32
    return %c0_i32, %c0_i32_0 : i32, i32
  }
  func.func @transform_3(%arg0: i32) -> (i32, i32) {
    %c0_i32 = arith.constant 0 : i32
    %c0_i32_0 = arith.constant 0 : i32
    %c0_i32_1 = arith.constant 0 : i32
    return %c0_i32, %c0_i32_0 : i32, i32
  }
}

</mosaic_0001>

<llo_original>
// kernel: tpu_custom_call.1
$region0: #{tpu_custom_call.1}
  #allocation0 [shape = 'u32[]', space=smem, size = 0x4, offset = 0x4, fixed_abs, tag = 'smem constant byte address 0x4 - core index']
  #allocation1 [shape = 'u32[144,128]{1,0:T(1,128)}', space=vmem, size = 0x12000, scoped, tag = 'internal scratch']
  %s0 = inlined_call_operand.vmem [shape: f32[8,32], index: 0, kind: input, shape index: {}]
  %s1 = inlined_call_operand.vmem [shape: s32[8,1], index: 1, kind: input, shape index: {}]
  %s2 = inlined_call_operand.vmem [shape: f32[1,32], index: 2, kind: input, shape index: {}]
  %s3 = inlined_call_operand.hbm [shape: f32[1,2], index: 3, kind: output, shape index: {}]
  %s4 = sld [smem:[#allocation0]]
  $region26: #{tpu_custom_call.1} parent=0
    _
  %s6 = ssub.s32 1, %s4
  %s7 = scalar_select 0, %s6, %s4
  $region1: #{tpu_custom_call.1} parent=0
    #allocation2 [shape = 'u8[512]{0}', space=smem, size = 0x200, scoped, tag = 'output window, operand 0, single buffered']
    #allocation3 [shape = 's32[1]{0}', space=sflag, size = 0x4, scoped, tag = 'scoped memory for tpu_custom_call.1']
    %8 = vsyncpa [#allocation3], 0
    // Predicated region
    $region2: #{tpu_custom_call.1} parent=1 // pred_check
      _
    $region3: #{tpu_custom_call.1} parent=1 // pred_check_branch
      %10 = sbr.rel (0) target = $region5
    $region4: #{tpu_custom_call.1} parent=1 // pred_region
      _
    $region5: #{tpu_custom_call.1} parent=1 // pred_fallthru
      _
    // Predicated region
    $region6: #{tpu_custom_call.1} parent=1 // pred_check
      _
    $region7: #{tpu_custom_call.1} parent=1 // pred_check_branch
      %12 = sbr.rel (0) target = $region9
    $region8: #{tpu_custom_call.1} parent=1 // pred_region
      _
    $region9: #{tpu_custom_call.1} parent=1 // pred_fallthru
      _
    // Predicated region
    $region10: #{tpu_custom_call.1} parent=1 // pred_check
      _
    $region11: #{tpu_custom_call.1} parent=1 // pred_check_branch
      %14 = sbr.rel (0) target = $region13
    $region12: #{tpu_custom_call.1} parent=1 // pred_region
      _
    $region13: #{tpu_custom_call.1} parent=1 // pred_fallthru
      _
    %p15 = scmp.eq.s32.totalorder 0, 0
    // Predicated region
    $region14: #{tpu_custom_call.1} parent=1 // pred_check
      %p16 = pneg %p15
    $region15: #{tpu_custom_call.1} parent=1 // pred_check_branch
      %18 = sbr.rel (%p16) target = $region17
    $region16: #{tpu_custom_call.1} parent=1 // pred_region
      %s19 = scalar_lea.smem [#allocation2], 0
      %20 = sst [smem:[%s19]] 0.0
      %s21 = scalar_lea.smem [#allocation2], 1
      %22 = sst [smem:[%s21]] 0.0
    $region17: #{tpu_custom_call.1} parent=1 // pred_fallthru
      _
    %v23 = vld [vmem:[%s0] sm:$0xff]
    %v24 = vld [vmem:[%s1] sm:$0xff]
    %v25 = vld [vmem:[%s2] sm:$0x1]
    %v26 = vlaneseq
    %v27 = vshrl.u32 %v26, 7
    %s28 = smul.u32 0, 8
    %v29 = vstv %s28
    %v30 = vadd.s32 %v27, %v29
    %vm31 = vcmp.lt.s32.totalorder %v30, 8
    %v32 = vsel %vm31, 1, 0
    %vm33 = vcmp.eq.s32.totalorder %v32, 1
    %v34 = vsel %vm33, %v23, 0.0
    %vm35 = vcmask 261120
    %v36 = vsel %vm35, %v34, -inf
    %37 = vmax.xlane.f32.xlu0 %v36
    %v38 = vpop.xlane.xlu0 %37
    %v39 = vsub.f32 %v34, %v38
    %v40 = vmul.f32 %v39, 1.442695
    %v41 = vpow.pop %v40
    %v42 = vsel %vm35, %v41, 0.0
    %43 = vadd.xlane.f32.xlu0 %v42
    %v44 = vpop.xlane.xlu0 %43
    %v45 = vlog2.pop %v44
    %v46 = vmul.f32 %v45, 0.6931472
    %v47 = vlaneseq
    %v48 = vand.u32 %v47, 127
    %49 = vset.pattern.permute.xlu0 0
    %50 = vperm.xlu0 %49, %v24
    %v51 = vpop.permute.xlu0 %50
    %vm52 = vcmp.eq.s32.totalorder %v48, %v51
    %v53 = vsel %vm52, 1, 0
    %v54 = vcvt.s32.f32 %v53
    %v55 = vmul.f32 %v54, %v39
    %v56 = vsel %vm35, %v55, 0.0
    %57 = vadd.xlane.f32.xlu0 %v56
    %v58 = vpop.xlane.xlu0 %57
    %v60 = vlaneseq
    %v61 = vshrl.u32 %v60, 7
    %v62 = vsub.s32 0, %v61
    %v63 = vrot.slane %v25, %v62
    %v65 = vmul.f32 %v54, %v63
    %v66 = vsel %vm35, %v65, 0.0
    %67 = vadd.xlane.f32.xlu0 %v66
    %v68 = vpop.xlane.xlu0 %67
    %v69 = vsub.f32 %v58, %v46
    %v70 = vmul.f32 %v69, 1.442695
    %v71 = vpow.pop %v70
    %v72 = vsub.f32 1.0, %v71
    %v73 = vmax.f32 %v72, 0.0
    %v74 = vmul.f32 %v73, %v73
    %v75 = vmul.f32 %v74, %v69
    %v76 = vsel %vm31, %v68, 0.0
    %s77 = sld [smem:[#allocation2]]
    %v78 = vmul.f32 %v76, %v75
    %vm79 = vcmask 7168
    %v80 = vsel %vm79, %v78, 0.0
    %81 = vadd.xlane.f32.xlu0 %v80
    %v82 = vpop.xlane.xlu0 %81
    %v83 = vrot.slane %v82, 4
    %v84 = vadd.f32 %v82, %v83
    %v85 = vrot.slane %v84, 2
    %v86 = vadd.f32 %v84, %v85
    %v87 = vrot.slane %v86, 1
    %v88 = vadd.f32 %v86, %v87
    %s89 = vtos %v88
    %s90 = sadd.f32 %s77, %s89
    %s91 = scalar_lea.smem [#allocation2], 0
    %92 = sst [smem:[%s91]] %s90
    %s93 = sld [smem:[#allocation2 + $0x1]]
    %v94 = vsel %vm79, %v76, 0.0
    %95 = vadd.xlane.f32.xlu0 %v94
    %v96 = vpop.xlane.xlu0 %95
    %v97 = vrot.slane %v96, 4
    %v98 = vadd.f32 %v96, %v97
    %v99 = vrot.slane %v98, 2
    %v100 = vadd.f32 %v98, %v99
    %v101 = vrot.slane %v100, 1
    %v102 = vadd.f32 %v100, %v101
    %s103 = vtos %v102
    %s104 = sadd.f32 %s93, %s103
    %s105 = scalar_lea.smem [#allocation2], 1
    %106 = sst [smem:[%s105]] %s104
    // Predicated region
    $region18: #{tpu_custom_call.1} parent=1 // pred_check
      _
    $region19: #{tpu_custom_call.1} parent=1 // pred_check_branch
      %108 = sbr.rel (0) target = $region21
    $region20: #{tpu_custom_call.1} parent=1 // pred_region
      %s110 = ssub.s32 16, 16
      %111 = vsyncadd [#allocation3], %s110
      %114 = dma.smem_to_hbm [#allocation2], 16, %s3, [#allocation3]
    $region21: #{tpu_custom_call.1} parent=1 // pred_fallthru
      _
    // Predicated region
    $region22: #{tpu_custom_call.1} parent=1 // pred_check
      _
    $region23: #{tpu_custom_call.1} parent=1 // pred_check_branch
      %116 = sbr.rel (0) target = $region25
    $region24: #{tpu_custom_call.1} parent=1 // pred_region
      %117 = dma.done [#allocation3], 16
    $region25: #{tpu_custom_call.1} parent=1 // pred_fallthru
      _
    %118 = sfence
    %119 = vsyncpa [#allocation3], 1

</llo_original>
